<compile_context>
chip_gen: v7x
topology: tpu7x:2x2x1
jax: 0.10.0
libtpu: 0.0.40
codegen_flags: <defaults>
</compile_context>

<pallas_src>
import jax
import jax.numpy as jnp
from jax.experimental import pallas as pl
from jax.experimental.pallas import tpu as pltpu


# ----------------------------------------------------------------------------
# Kernel
# ----------------------------------------------------------------------------
def _concat_skip_kernel(x_ref, s_ref, wx_ref, ws_ref, p_ref, o_ref):
    # x_ref, s_ref : (TM, D) native activation dtype
    # wx_ref, ws_ref: (D, D) compute dtype (resident, constant across grid)
    # p_ref        : (3, D) f32  -- rows = [bias, gamma, beta]
    # o_ref        : (TM, D) output dtype
    cdt = wx_ref.dtype
    # Cast activations tile-by-tile inside the kernel (hides under the MXU);
    # avoids a separate wrapper-side HBM pass for the cast.
    y = jnp.dot(x_ref[...].astype(cdt), wx_ref[...],
                preferred_element_type=jnp.float32)
    y = y + jnp.dot(s_ref[...].astype(cdt), ws_ref[...],
                    preferred_element_type=jnp.float32)
    y = y + p_ref[0:1, :]                                  # bias (f32, bcast)

    # LayerNorm over last dim, eps=1e-6, biased variance (matches nn.LayerNorm).
    mean = jnp.mean(y, axis=-1, keepdims=True)
    centered = y - mean
    var = jnp.mean(centered * centered, axis=-1, keepdims=True)
    y_norm = centered * jax.lax.rsqrt(var + 1e-6)
    o_ref[...] = (y_norm * p_ref[1:2, :] + p_ref[2:3, :]).astype(o_ref.dtype)


# ----------------------------------------------------------------------------
# One-time parameter preparation (module-init, NOT per call)
# ----------------------------------------------------------------------------
def prepare_concat_skip_params(w_t, bias, gamma, beta, *,
                               compute_dtype=jnp.bfloat16):
    """Split/cast the (2D, D) linear weight and pack the LN params once.

    w_t  : (2D, D)  -- transpose of nn.Linear(2D, D).weight
    bias, gamma, beta : (D,)
    Returns (wx, ws, ln_params) with wx/ws (D, D) in compute_dtype and
    ln_params = stack([bias, gamma, beta]) as (3, D) f32.
    """
    D = w_t.shape[1]
    assert w_t.shape == (2 * D, D)
    wx = w_t[:D, :].astype(compute_dtype)      # half acting on x
    ws = w_t[D:, :].astype(compute_dtype)      # half acting on skip
    ln_params = jnp.stack([bias, gamma, beta]).astype(jnp.float32)  # (3, D)
    return wx, ws, ln_params


# ----------------------------------------------------------------------------
# VMEM budgeting / tile selection
# ----------------------------------------------------------------------------
def _working_set_bytes(tile_m, D, x_bytes, out_bytes, c_bytes):
    return (2 * 2 * tile_m * D * x_bytes       # x + skip row tiles, double-buffered
            + 2 * tile_m * D * out_bytes       # output row tile, double-buffered
            + 2 * 2 * D * D * c_bytes          # Wx + Ws constant blocks (2 bufs each)
            + 2 * 3 * D * 4                    # packed bias/gamma/beta
            + 3 * tile_m * D * 4)              # f32 y / LN temporaries headroom


def _pick_tile_m(rows, D, x_bytes, out_bytes, c_bytes,
                 vmem_budget=52 * 1024 * 1024):
    # Start at 512 rows (≈85% of HBM roofline on v6e, multiple of the 256-wide
    # MXU) and shrink until the working set fits the VMEM budget (v7x: 64 MiB
    # physical; keep headroom).
    tile = 512
    while tile > 64 and _working_set_bytes(tile, D, x_bytes, out_bytes,
                                           c_bytes) > vmem_budget:
        tile //= 2
    # Guarantee >= 2 grid iterations where possible so ("parallel",) actually
    # shards row tiles across both TensorCores on v7x.
    two_way = max(8, (((rows + 1) // 2) + 7) // 8 * 8)
    return max(8, min(tile, two_way))


# ----------------------------------------------------------------------------
# Public wrapper
# ----------------------------------------------------------------------------
def concat_skip_layer(x, skip, wx, ws, ln_params, *,
                      tile_m=None, out_dtype=None,
                      vmem_budget=52 * 1024 * 1024):
    """Fused concat + Linear(2D -> D) + LayerNorm(D, eps=1e-6).

    x, skip   : (B, N, D) activations (streamed in native dtype; no wrapper cast)
    wx, ws    : (D, D) pre-split / pre-cast weight halves (see prepare_...)
    ln_params : (3, D) f32 packed [bias; gamma; beta]
    out_dtype : output dtype (default: x.dtype; pass bf16 to halve writeback)
    """
    B, N, D = x.shape
    assert skip.shape == (B, N, D)
    assert wx.shape == (D, D) and ws.shape == (D, D)
    assert ln_params.shape == (3, D)
    # Lane-dense (unmasked vst) output stores need a 128-aligned feature dim.
    assert D % 128 == 0, "embed_dim must be a multiple of 128"
    # TODO(synk): support non-128-aligned embed_dim via feature padding + masked LayerNorm.
    # TODO(synk): K-tile the resident weights for very large embed_dim (>~3K) where
    #             2 double-buffered (D, D) halves no longer fit VMEM.

    rows = B * N
    out_dtype = x.dtype if out_dtype is None else out_dtype
    x_bytes = jnp.dtype(x.dtype).itemsize
    s_bytes = jnp.dtype(skip.dtype).itemsize
    c_bytes = jnp.dtype(wx.dtype).itemsize
    o_bytes = jnp.dtype(out_dtype).itemsize

    if tile_m is None:
        tile_m = _pick_tile_m(rows, D, x_bytes, o_bytes, c_bytes,
                              vmem_budget=vmem_budget)
    num_tiles = pl.cdiv(rows, tile_m)

    # Flat row view; no padding — the cdiv grid's ragged last block is masked
    # on writeback and the garbage rows never mix across the row axis (LN is
    # strictly per-row).
    x2 = x.reshape(rows, D)
    s2 = skip.reshape(rows, D)

    cost = pl.CostEstimate(
        flops=4 * rows * D * D,                       # two (TM,D)x(D,D) dots
        transcendentals=rows,                         # one rsqrt per row
        bytes_accessed=(rows * D * (x_bytes + s_bytes + o_bytes)
                        + 2 * D * D * c_bytes
                        + 3 * D * 4),
    )

    vmem_limit = int(min(
        max(int(1.25 * _working_set_bytes(tile_m, D, x_bytes, o_bytes, c_bytes))
            + (4 << 20), 32 << 20),
        64 << 20))

    row_spec = pl.BlockSpec((tile_m, D), lambda i: (i, 0))
    const_w = pl.BlockSpec((D, D), lambda i: (0, 0))       # resident weights
    const_p = pl.BlockSpec((3, D), lambda i: (0, 0))       # packed LN params

    out = pl.pallas_call(
        _concat_skip_kernel,
        out_shape=jax.ShapeDtypeStruct((rows, D), out_dtype),
        grid_spec=pltpu.PrefetchScalarGridSpec(
            num_scalar_prefetch=0,
            grid=(num_tiles,),
            in_specs=[row_spec, row_spec,     # x, skip row tiles
                      const_w, const_w,       # Wx, Ws (constant index -> 1 DMA)
                      const_p],               # bias/gamma/beta packed
            out_specs=row_spec,
        ),
        compiler_params=pltpu.CompilerParams(
            dimension_semantics=("parallel",),   # shard row tiles across TCs
            vmem_limit_bytes=vmem_limit,
        ),
        cost_estimate=cost,
    )(x2, s2, wx, ws, ln_params)

    return out.reshape(B, N, D)


# ----------------------------------------------------------------------------
# Reference + self-test
# ----------------------------------------------------------------------------
def _reference(x, skip, w_t, bias, gamma, beta, *, matmul_dtype=jnp.float32):
    cat = jnp.concatenate([x, skip], axis=-1).astype(matmul_dtype)
    y = jnp.einsum("bnk,kd->bnd", cat, w_t.astype(matmul_dtype),
                   preferred_element_type=jnp.float32) + bias
    mean = jnp.mean(y, axis=-1, keepdims=True)
    var = jnp.mean((y - mean) ** 2, axis=-1, keepdims=True)
    yn = (y - mean) / jnp.sqrt(var + 1e-6)
    return yn * gamma + beta


if __name__ == "__main__":
    B, N, D = 2, 8, 128  # batch, seq, embed_dim (128-aligned)

    key = jax.random.PRNGKey(0)
    k_x, k_s, k_w, k_b = jax.random.split(key, 4)

    x = jax.random.normal(k_x, (B, N, D), dtype=jnp.float32)
    skip = jax.random.normal(k_s, (B, N, D), dtype=jnp.float32)

    # nn.Linear(2D, D): weight (D, 2D), bias (D,).  Kernel takes the transpose.
    bound = 1.0 / jnp.sqrt(2.0 * D)
    w = jax.random.uniform(k_w, (D, 2 * D), minval=-bound, maxval=bound,
                           dtype=jnp.float32)
    bias = jax.random.uniform(k_b, (D,), minval=-bound, maxval=bound,
                              dtype=jnp.float32)
    w_t = w.T  # (2D, D)

    # nn.LayerNorm default init
    gamma = jnp.ones((D,), dtype=jnp.float32)
    beta = jnp.zeros((D,), dtype=jnp.float32)

    # One-time (init-style) weight split/cast + LN-param packing.
    wx, ws, ln_params = prepare_concat_skip_params(w_t, bias, gamma, beta,
                                                   compute_dtype=jnp.bfloat16)

    # f32-in / f32-out path (default out_dtype = x.dtype).
    out = concat_skip_layer(x, skip, wx, ws, ln_params)
    out = jax.block_until_ready(out)
    assert out.shape == (B, N, D)

    # Reference matched to the kernel's compute path (bf16 matmul operands,
    # f32 accumulation + f32 LayerNorm): tight check.
    ref_bf16 = _reference(x, skip, w_t, bias, gamma, beta,
                          matmul_dtype=jnp.bfloat16)
    assert jnp.allclose(out, ref_bf16, atol=1.5e-2, rtol=1.5e-2), \
        "mismatch vs bf16-matched reference"

    # Sanity check against the full-f32 reference (bf16 matmul tolerance).
    ref_f32 = _reference(x, skip, w_t, bias, gamma, beta,
                         matmul_dtype=jnp.float32)
    assert jnp.allclose(out, ref_f32, atol=6e-2, rtol=6e-2), \
        "mismatch vs f32 reference"

    # bf16-output path (halves writeback bytes for consumers that accept it).
    out_bf16 = concat_skip_layer(x, skip, wx, ws, ln_params,
                                 out_dtype=jnp.bfloat16)
    out_bf16 = jax.block_until_ready(out_bf16)
    assert out_bf16.dtype == jnp.bfloat16
    assert jnp.allclose(out_bf16.astype(jnp.float32), ref_bf16,
                        atol=4e-2, rtol=4e-2), "mismatch (bf16 output path)"

    print("KERNEL_OK")
</pallas_src>

<mosaic_0001>
module attributes {stable_mosaic.version = 11 : i64} {
  func.func @_concat_skip_kernel(%arg0: i32, %arg1: memref<8x128xf32, #tpu.memory_space<vmem>>, %arg2: memref<8x128xf32, #tpu.memory_space<vmem>>, %arg3: memref<128x128xbf16, #tpu.memory_space<vmem>>, %arg4: memref<128x128xbf16, #tpu.memory_space<vmem>>, %arg5: memref<3x128xf32, #tpu.memory_space<vmem>>, %arg6: memref<8x128xf32, #tpu.memory_space<vmem>>) attributes {dimension_semantics = [#tpu.dimension_semantics<parallel>], iteration_bounds = array<i64: 2>, scalar_prefetch = 0 : i64, scratch_operands = 0 : i64, tpu.core_type = #tpu.core_type<tc>, window_params = [{transform_indices = @transform_0, window_bounds = array<i64: 8, 128>}, {transform_indices = @transform_1, window_bounds = array<i64: 8, 128>}, {pipeline_mode = #tpu.pipeline_mode<synchronous>, transform_indices = @transform_2, window_bounds = array<i64: 128, 128>}, {pipeline_mode = #tpu.pipeline_mode<synchronous>, transform_indices = @transform_3, window_bounds = array<i64: 128, 128>}, {pipeline_mode = #tpu.pipeline_mode<synchronous>, transform_indices = @transform_4, window_bounds = array<i64: 3, 128>}, {transform_indices = @transform_5, window_bounds = array<i64: 8, 128>}]} {
    %c0 = arith.constant 0 : index
    %c0_0 = arith.constant 0 : index
    %0 = vector.load %arg1[%c0, %c0_0] : memref<8x128xf32, #tpu.memory_space<vmem>>, vector<8x128xf32>
    %1 = arith.truncf %0 : vector<8x128xf32> to vector<8x128xbf16>
    %c0_1 = arith.constant 0 : index
    %c0_2 = arith.constant 0 : index
    %2 = vector.load %arg3[%c0_1, %c0_2] : memref<128x128xbf16, #tpu.memory_space<vmem>>, vector<128x128xbf16>
    %cst = arith.constant dense<0.000000e+00> : vector<8x128xf32>
    %3 = tpu.matmul %1, %2, %cst {dimension_numbers = #tpu.dot_dimension_numbers<[1], [0], [0], [1], [0, 0, 1, 1], [], []>} : vector<8x128xbf16>, vector<128x128xbf16>, vector<8x128xf32> -> vector<8x128xf32>
    %c0_3 = arith.constant 0 : index
    %c0_4 = arith.constant 0 : index
    %4 = vector.load %arg2[%c0_3, %c0_4] : memref<8x128xf32, #tpu.memory_space<vmem>>, vector<8x128xf32>
    %5 = arith.truncf %4 : vector<8x128xf32> to vector<8x128xbf16>
    %c0_5 = arith.constant 0 : index
    %c0_6 = arith.constant 0 : index
    %6 = vector.load %arg4[%c0_5, %c0_6] : memref<128x128xbf16, #tpu.memory_space<vmem>>, vector<128x128xbf16>
    %cst_7 = arith.constant dense<0.000000e+00> : vector<8x128xf32>
    %7 = tpu.matmul %5, %6, %cst_7 {dimension_numbers = #tpu.dot_dimension_numbers<[1], [0], [0], [1], [0, 0, 1, 1], [], []>} : vector<8x128xbf16>, vector<128x128xbf16>, vector<8x128xf32> -> vector<8x128xf32>
    %8 = arith.addf %3, %7 : vector<8x128xf32>
    %c0_8 = arith.constant 0 : index
    %c0_9 = arith.constant 0 : index
    %9 = vector.load %arg5[%c0_8, %c0_9] : memref<3x128xf32, #tpu.memory_space<vmem>>, vector<1x128xf32>
    %10 = vector.broadcast %9 : vector<1x128xf32> to vector<8x128xf32>
    %11 = arith.addf %8, %10 : vector<8x128xf32>
    %cst_10 = arith.constant dense<0.000000e+00> : vector<8xf32>
    %12 = vector.multi_reduction <add>, %11, %cst_10 [1] : vector<8x128xf32> to vector<8xf32>
    %13 = vector.shape_cast %12 : vector<8xf32> to vector<8x1xf32>
    %cst_11 = arith.constant 1.280000e+02 : f32
    %14 = vector.broadcast %cst_11 : f32 to vector<8x1xf32>
    %15 = arith.divf %13, %14 : vector<8x1xf32>
    %16 = vector.broadcast %15 : vector<8x1xf32> to vector<8x128xf32>
    %17 = arith.subf %11, %16 : vector<8x128xf32>
    %18 = arith.mulf %17, %17 : vector<8x128xf32>
    %cst_12 = arith.constant dense<0.000000e+00> : vector<8xf32>
    %19 = vector.multi_reduction <add>, %18, %cst_12 [1] : vector<8x128xf32> to vector<8xf32>
    %20 = vector.shape_cast %19 : vector<8xf32> to vector<8x1xf32>
    %cst_13 = arith.constant 1.280000e+02 : f32
    %21 = vector.broadcast %cst_13 : f32 to vector<8x1xf32>
    %22 = arith.divf %20, %21 : vector<8x1xf32>
    %cst_14 = arith.constant 9.99999997E-7 : f32
    %23 = vector.broadcast %cst_14 : f32 to vector<8x1xf32>
    %24 = arith.addf %22, %23 : vector<8x1xf32>
    %25 = math.rsqrt %24 : vector<8x1xf32>
    %26 = vector.broadcast %25 : vector<8x1xf32> to vector<8x128xf32>
    %27 = arith.mulf %17, %26 : vector<8x128xf32>
    %c1 = arith.constant 1 : index
    %c0_15 = arith.constant 0 : index
    %28 = vector.load %arg5[%c1, %c0_15] : memref<3x128xf32, #tpu.memory_space<vmem>>, vector<1x128xf32>
    %29 = vector.broadcast %28 : vector<1x128xf32> to vector<8x128xf32>
    %30 = arith.mulf %27, %29 : vector<8x128xf32>
    %c2 = arith.constant 2 : index
    %c0_16 = arith.constant 0 : index
    %31 = vector.load %arg5[%c2, %c0_16] : memref<3x128xf32, #tpu.memory_space<vmem>>, vector<1x128xf32>
    %32 = vector.broadcast %31 : vector<1x128xf32> to vector<8x128xf32>
    %33 = arith.addf %30, %32 : vector<8x128xf32>
    %c0_17 = arith.constant 0 : index
    %c0_18 = arith.constant 0 : index
    %34 = vector.load %arg6[%c0_17, %c0_18] : memref<8x128xf32, #tpu.memory_space<vmem>>, vector<8x128xf32>
    tpu.vector_store %arg6[%c0_17, %c0_18], %33 {strides = array<i32>} : memref<8x128xf32, #tpu.memory_space<vmem>>, vector<8x128xf32>,
    return
  }
  func.func @transform_0(%arg0: i32) -> (i32, i32) {
    %c0_i32 = arith.constant 0 : i32
    %c0_i32_0 = arith.constant 0 : i32
    return %arg0, %c0_i32 : i32, i32
  }
  func.func @transform_1(%arg0: i32) -> (i32, i32) {
    %c0_i32 = arith.constant 0 : i32
    %c0_i32_0 = arith.constant 0 : i32
    return %arg0, %c0_i32 : i32, i32
  }
  func.func @transform_2(%arg0: i32) -> (i32, i32) {
    %c0_i32 = arith.constant 0 : i32
    %c0_i32_0 = arith.constant 0 : i32
    %c0_i32_1 = arith.constant 0 : i32
    return %c0_i32, %c0_i32_0 : i32, i32
  }
  func.func @transform_3(%arg0: i32) -> (i32, i32) {
    %c0_i32 = arith.constant 0 : i32
    %c0_i32_0 = arith.constant 0 : i32
    %c0_i32_1 = arith.constant 0 : i32
    return %c0_i32, %c0_i32_0 : i32, i32
  }
  func.func @transform_4(%arg0: i32) -> (i32, i32) {
    %c0_i32 = arith.constant 0 : i32
    %c0_i32_0 = arith.constant 0 : i32
    %c0_i32_1 = arith.constant 0 : i32
    return %c0_i32, %c0_i32_0 : i32, i32
  }
  func.func @transform_5(%arg0: i32) -> (i32, i32) {
    %c0_i32 = arith.constant 0 : i32
    %c0_i32_0 = arith.constant 0 : i32
    return %arg0, %c0_i32 : i32, i32
  }
}

</mosaic_0001>

<llo_original>
// kernel: tpu_custom_call.1
$region0: #{tpu_custom_call.1}
  #allocation0 [shape = 'u32[]', space=smem, size = 0x4, offset = 0x4, fixed_abs, tag = 'smem constant byte address 0x4 - core index']
  #allocation1 [shape = 'u32[144,128]{1,0:T(1,128)}', space=vmem, size = 0x12000, scoped, tag = 'internal scratch']
  %s0 = inlined_call_operand.hbm [shape: f32[16,128], index: 0, kind: input, shape index: {}]
  %s1 = inlined_call_operand.hbm [shape: f32[16,128], index: 1, kind: input, shape index: {}]
  %s2 = inlined_call_operand.hbm [shape: bf16[128,128], index: 2, kind: input, shape index: {}]
  %s3 = inlined_call_operand.hbm [shape: bf16[128,128], index: 3, kind: input, shape index: {}]
  %s4 = inlined_call_operand.vmem [shape: f32[3,128], index: 4, kind: input, shape index: {}]
  %s5 = inlined_call_operand.hbm [shape: f32[16,128], index: 5, kind: output, shape index: {}]
  %s6 = sld [smem:[#allocation0]]
  $region69: #{tpu_custom_call.1} parent=0
    _
  %s8 = ssub.s32 1, %s6
  %s9 = scalar_select 0, %s8, %s6
  $region1: #{tpu_custom_call.1} parent=0
    #allocation2 [shape = 'u8[8192]{0}', space=vmem, size = 0x2000, scoped, tag = 'input window, operand 0']
    #allocation3 [shape = 's32[2]{0}', space=sflag, size = 0x8, scoped, tag = 'scoped memory for tpu_custom_call.1']
    #allocation4 [shape = 's32[2]{0}', space=sflag, size = 0x8, scoped, tag = 'scoped memory for tpu_custom_call.1']
    #allocation5 [shape = 'u8[8192]{0}', space=vmem, size = 0x2000, scoped, tag = 'input window, operand 1']
    #allocation6 [shape = 's32[2]{0}', space=sflag, size = 0x8, scoped, tag = 'scoped memory for tpu_custom_call.1']
    #allocation7 [shape = 'u8[32768]{0}', space=vmem, size = 0x8000, scoped, tag = 'input window, operand 2, single buffered']
    #allocation8 [shape = 'u8[32768]{0}', space=vmem, size = 0x8000, scoped, tag = 'input window, operand 3, single buffered']
    #allocation9 [shape = 's32[1]{0}', space=sflag, size = 0x4, scoped, tag = 'scoped memory for tpu_custom_call.1']
    #allocation10 [shape = 'u8[8192]{0}', space=vmem, size = 0x2000, scoped, tag = 'output window, operand 0']
    %10 = vsyncpa [#allocation3], 0
    %s11 = scalar_lea.sflag [#allocation3], 1
    %12 = vsyncpa %s11, 0
    %13 = vsyncpa [#allocation6], 0
    %s14 = scalar_lea.sflag [#allocation6], 1
    %15 = vsyncpa %s14, 0
    %16 = vsyncpa [#allocation9], 0
    %17 = vsyncpa [#allocation4], 0
    %s18 = scalar_lea.sflag [#allocation4], 1
    %19 = vsyncpa %s18, 0
    loop: start=0, step=1, limit=4
    $region2: #{tpu_custom_call.1} parent=1 // loop_pre_header
      _
    $region3: #{tpu_custom_call.1} parent=1 // loop_header
      %s21 = sphi 0, %s25
      %p22 = scmp.ge.s32.totalorder %s21, 4
      %s31 = sphi 0, %s33
      %s34 = sphi 0, %s31
      %s35 = sphi 0, %s34
      %s51 = sphi 0, %s35
      %s57 = sphi 0, %s59
      %s60 = sphi 0, %s57
      %s61 = sphi 0, %s60
      %s77 = sphi 0, %s61
      %s81 = sphi 0, %s81
      %s83 = sphi 0, %s81
      %s84 = sphi 0, %s83
      %s98 = sphi 0, %s84
      %s102 = sphi 0, %s102
      %s104 = sphi 0, %s102
      %s105 = sphi 0, %s104
      %s119 = sphi 0, %s105
      %s123 = sphi 0, %s123
      %s125 = sphi 0, %s123
      %s126 = sphi 0, %s125
      %s140 = sphi 0, %s126
      %s146 = sphi 0, %s148
      %s149 = sphi 0, %s146
      %s150 = sphi 0, %s149
      %s166 = sphi 0, %s150
    $region4: #{tpu_custom_call.1} parent=1 // loop_header_branch
      %24 = sbr.rel (%p22) target = $region8
    $region5: #{tpu_custom_call.1} parent=1 // loop_body
      %s26 = ssub.s32 %s21, 1
      %s27 = ssub.s32 %s21, 2
      %s28 = sadd.s32 %s21, 1
      %s29 = ssub.s32 %s21, %s28
      %p30 = scmp.eq.s32.totalorder %s29, 0
      %s32 = sadd.s32 %s31, 1
      %s33 = scalar_select %p30, %s31, %s32
      %p36 = pneg %p30
      %p37 = scmp.eq.s32.totalorder %s21, 1
      %p38 = por %p36, %p37
      %p39 = scmp.ne.s32.totalorder %s31, %s34
      %p40 = scmp.eq.s32.totalorder %s21, 0
      %p41 = por %p39, %p40
      %p42 = scmp.ne.s32.totalorder %s31, %s34
      %p43 = scmp.eq.s32.totalorder %s26, 1
      %p44 = por %p42, %p43
      %p45 = scmp.ne.s32.totalorder %s34, %s35
      %p46 = scmp.eq.s32.totalorder %s26, 0
      %p47 = por %p45, %p46
      %p48 = scmp.ne.s32.totalorder %s34, %s35
      %p49 = scmp.eq.s32.totalorder %s27, 1
      %p50 = por %p48, %p49
      %p52 = scmp.ne.s32.totalorder %s35, %s51
      %p53 = scmp.eq.s32.totalorder %s27, 0
      %p54 = por %p52, %p53
      %s55 = ssub.s32 %s21, %s28
      %p56 = scmp.eq.s32.totalorder %s55, 0
      %s58 = sadd.s32 %s57, 1
      %s59 = scalar_select %p56, %s57, %s58
      %p62 = pneg %p56
      %p63 = scmp.eq.s32.totalorder %s21, 1
      %p64 = por %p62, %p63
      %p65 = scmp.ne.s32.totalorder %s57, %s60
      %p66 = scmp.eq.s32.totalorder %s21, 0
      %p67 = por %p65, %p66
      %p68 = scmp.ne.s32.totalorder %s57, %s60
      %p69 = scmp.eq.s32.totalorder %s26, 1
      %p70 = por %p68, %p69
      %p71 = scmp.ne.s32.totalorder %s60, %s61
      %p72 = scmp.eq.s32.totalorder %s26, 0
      %p73 = por %p71, %p72
      %p74 = scmp.ne.s32.totalorder %s60, %s61
      %p75 = scmp.eq.s32.totalorder %s27, 1
      %p76 = por %p74, %p75
      %p78 = scmp.ne.s32.totalorder %s61, %s77
      %p79 = scmp.eq.s32.totalorder %s27, 0
      %p80 = por %p78, %p79
      %s82 = sadd.s32 %s81, 1
      %p85 = scmp.eq.s32.totalorder %s21, 1
      %p86 = scmp.ne.s32.totalorder %s81, %s83
      %p87 = scmp.eq.s32.totalorder %s21, 0
      %p88 = por %p86, %p87
      %p89 = scmp.ne.s32.totalorder %s81, %s83
      %p90 = scmp.eq.s32.totalorder %s26, 1
      %p91 = por %p89, %p90
      %p92 = scmp.ne.s32.totalorder %s83, %s84
      %p93 = scmp.eq.s32.totalorder %s26, 0
      %p94 = por %p92, %p93
      %p95 = scmp.ne.s32.totalorder %s83, %s84
      %p96 = scmp.eq.s32.totalorder %s27, 1
      %p97 = por %p95, %p96
      %p99 = scmp.ne.s32.totalorder %s84, %s98
      %p100 = scmp.eq.s32.totalorder %s27, 0
      %p101 = por %p99, %p100
      %s103 = sadd.s32 %s102, 1
      %p106 = scmp.eq.s32.totalorder %s21, 1
      %p107 = scmp.ne.s32.totalorder %s102, %s104
      %p108 = scmp.eq.s32.totalorder %s21, 0
      %p109 = por %p107, %p108
      %p110 = scmp.ne.s32.totalorder %s102, %s104
      %p111 = scmp.eq.s32.totalorder %s26, 1
      %p112 = por %p110, %p111
      %p113 = scmp.ne.s32.totalorder %s104, %s105
      %p114 = scmp.eq.s32.totalorder %s26, 0
      %p115 = por %p113, %p114
      %p116 = scmp.ne.s32.totalorder %s104, %s105
      %p117 = scmp.eq.s32.totalorder %s27, 1
      %p118 = por %p116, %p117
      %p120 = scmp.ne.s32.totalorder %s105, %s119
      %p121 = scmp.eq.s32.totalorder %s27, 0
      %p122 = por %p120, %p121
      %s124 = sadd.s32 %s123, 1
      %p127 = scmp.eq.s32.totalorder %s21, 1
      %p128 = scmp.ne.s32.totalorder %s123, %s125
      %p129 = scmp.eq.s32.totalorder %s21, 0
      %p130 = por %p128, %p129
      %p131 = scmp.ne.s32.totalorder %s123, %s125
      %p132 = scmp.eq.s32.totalorder %s26, 1
      %p133 = por %p131, %p132
      %p134 = scmp.ne.s32.totalorder %s125, %s126
      %p135 = scmp.eq.s32.totalorder %s26, 0
      %p136 = por %p134, %p135
      %p137 = scmp.ne.s32.totalorder %s125, %s126
      %p138 = scmp.eq.s32.totalorder %s27, 1
      %p139 = por %p137, %p138
      %p141 = scmp.ne.s32.totalorder %s126, %s140
      %p142 = scmp.eq.s32.totalorder %s27, 0
      %p143 = por %p141, %p142
      %s144 = ssub.s32 %s21, %s28
      %p145 = scmp.eq.s32.totalorder %s144, 0
      %s147 = sadd.s32 %s146, 1
      %s148 = scalar_select %p145, %s146, %s147
      %p151 = pneg %p145
      %p152 = scmp.eq.s32.totalorder %s21, 1
      %p153 = por %p151, %p152
      %p154 = scmp.ne.s32.totalorder %s146, %s149
      %p155 = scmp.eq.s32.totalorder %s21, 0
      %p156 = por %p154, %p155
      %p157 = scmp.ne.s32.totalorder %s146, %s149
      %p158 = scmp.eq.s32.totalorder %s26, 1
      %p159 = por %p157, %p158
      %p160 = scmp.ne.s32.totalorder %s149, %s150
      %p161 = scmp.eq.s32.totalorder %s26, 0
      %p162 = por %p160, %p161
      %p163 = scmp.ne.s32.totalorder %s149, %s150
      %p164 = scmp.eq.s32.totalorder %s27, 1
      %p165 = por %p163, %p164
      %p167 = scmp.ne.s32.totalorder %s150, %s166
      %p168 = scmp.eq.s32.totalorder %s27, 0
      %p169 = por %p167, %p168
      %p170 = scmp.le.s32.totalorder 1, %s21
      %p171 = scmp.lt.s32.totalorder %s21, 3
      %p172 = pnand %p170, %p171
      %p173 = pneg %p172
      // Predicated region
      $region9: #{tpu_custom_call.1} parent=5 // pred_check
        _
      $region10: #{tpu_custom_call.1} parent=5 // pred_check_branch
        %175 = sbr.rel (%p172) target = $region12
      $region11: #{tpu_custom_call.1} parent=5 // pred_region
        %s176 = ssub.s32 %s21, 1
        // Predicated region
        $region13: #{tpu_custom_call.1} parent=11 // pred_check
          %p177 = pneg %p94
        $region14: #{tpu_custom_call.1} parent=11 // pred_check_branch
          %179 = sbr.rel (%p177) target = $region16
        $region15: #{tpu_custom_call.1} parent=11 // pred_region
          %s181 = ssub.s32 1024, 1024
          %182 = vsyncadd [#allocation6], %s181
          %s183 = sshll.u32 [#allocation7], 4
          %s184 = int_to_ptr.vmem [resolvable:$true] %s183
          %189 = dma.hbm_to_vmem [thread:$0]  %s2, 1024, %s184, [#allocation6], 64, 64, 4
        $region16: #{tpu_custom_call.1} parent=11 // pred_fallthru
          _
        // Predicated region
        $region17: #{tpu_custom_call.1} parent=11 // pred_check
          %p190 = pneg %p115
        $region18: #{tpu_custom_call.1} parent=11 // pred_check_branch
          %192 = sbr.rel (%p190) target = $region20
        $region19: #{tpu_custom_call.1} parent=11 // pred_region
          %s194 = ssub.s32 1024, 1024
          %195 = vsyncadd [#allocation9], %s194
          %s196 = sshll.u32 [#allocation8], 4
          %s197 = int_to_ptr.vmem [resolvable:$true] %s196
          %202 = dma.hbm_to_vmem [thread:$0]  %s3, 1024, %s197, [#allocation9], 64, 64, 4
        $region20: #{tpu_custom_call.1} parent=11 // pred_fallthru
          _
        // Predicated region
        $region21: #{tpu_custom_call.1} parent=11 // pred_check
          %p203 = pneg %p136
        $region22: #{tpu_custom_call.1} parent=11 // pred_check_branch
          %205 = sbr.rel (%p203) target = $region24
        $region23: #{tpu_custom_call.1} parent=11 // pred_region
          _
        $region24: #{tpu_custom_call.1} parent=11 // pred_fallthru
          _
      $region12: #{tpu_custom_call.1} parent=5 // pred_fallthru
        _
      %p206 = scmp.lt.s32.totalorder %s21, 2
      // Predicated region
      $region25: #{tpu_custom_call.1} parent=5 // pred_check
        %p207 = pneg %p206
      $region26: #{tpu_custom_call.1} parent=5 // pred_check_branch
        %209 = sbr.rel (%p207) target = $region28
      $region27: #{tpu_custom_call.1} parent=5 // pred_region
        // Predicated region
        $region29: #{tpu_custom_call.1} parent=27 // pred_check
          %p210 = pneg %p41
        $region30: #{tpu_custom_call.1} parent=27 // pred_check_branch
          %212 = sbr.rel (%p210) target = $region32
        $region31: #{tpu_custom_call.1} parent=27 // pred_region
          %s213 = sand.u32 %s31, 1
          %s214 = scalar_lea.sflag [#allocation3], %s213
          %s215 = sand.u32 %s31, 1
          %s216 = smul.addr %s215, 8
          %s217 = scalar_lea.vmem [#allocation2], %s216
          %s219 = ssub.s32 128, 128
          %220 = vsyncadd %s214, %s219
          %s221 = smul.addr %s21, 128
          %s222 = scalar_lea.hbm %s0, %s221
          %s224 = sshll.u32 %s217, 4
          %s225 = int_to_ptr.vmem [resolvable:$true] %s224
          %227 = dma.hbm_to_vmem [thread:$0]  %s222, 128, %s225, %s214
        $region32: #{tpu_custom_call.1} parent=27 // pred_fallthru
          _
        // Predicated region
        $region33: #{tpu_custom_call.1} parent=27 // pred_check
          %p228 = pneg %p67
        $region34: #{tpu_custom_call.1} parent=27 // pred_check_branch
          %230 = sbr.rel (%p228) target = $region36
        $region35: #{tpu_custom_call.1} parent=27 // pred_region
          %s231 = sand.u32 %s21, 1
          %s232 = scalar_lea.sflag [#allocation6], %s231
          %s233 = sand.u32 %s57, 1
          %s234 = smul.addr %s233, 8
          %s235 = scalar_lea.vmem [#allocation5], %s234
          %s237 = ssub.s32 128, 128
          %238 = vsyncadd %s232, %s237
          %s239 = smul.addr %s21, 128
          %s240 = scalar_lea.hbm %s1, %s239
          %s242 = sshll.u32 %s235, 4
          %s243 = int_to_ptr.vmem [resolvable:$true] %s242
          %245 = dma.hbm_to_vmem [thread:$0]  %s240, 128, %s243, %s232
        $region36: #{tpu_custom_call.1} parent=27 // pred_fallthru
          _
      $region28: #{tpu_custom_call.1} parent=5 // pred_fallthru
        _
      %p246 = scmp.le.s32.totalorder 1, %s21
      %p247 = scmp.lt.s32.totalorder %s21, 3
      %p248 = pnand %p246, %p247
      %p249 = pneg %p248
      // Predicated region
      $region37: #{tpu_custom_call.1} parent=5 // pred_check
        _
      $region38: #{tpu_custom_call.1} parent=5 // pred_check_branch
        %251 = sbr.rel (%p248) target = $region40
      $region39: #{tpu_custom_call.1} parent=5 // pred_region
        %s252 = ssub.s32 %s21, 1
        %s253 = sand.u32 %s34, 1
        %s254 = scalar_lea.sflag [#allocation3], %s253
        %s255 = sand.u32 %s34, 1
        %s256 = smul.addr %s255, 8
        %s257 = scalar_lea.vmem [#allocation2], %s256
        // Predicated region
        $region41: #{tpu_custom_call.1} parent=39 // pred_check
          %p258 = pneg %p47
        $region42: #{tpu_custom_call.1} parent=39 // pred_check_branch
          %260 = sbr.rel (%p258) target = $region44
        $region43: #{tpu_custom_call.1} parent=39 // pred_region
          %261 = dma.done %s254, 128
        $region44: #{tpu_custom_call.1} parent=39 // pred_fallthru
          _
        %s262 = sand.u32 %s26, 1
        %s263 = scalar_lea.sflag [#allocation6], %s262
        %s264 = sand.u32 %s60, 1
        %s265 = smul.addr %s264, 8
        %s266 = scalar_lea.vmem [#allocation5], %s265
        // Predicated region
        $region45: #{tpu_custom_call.1} parent=39 // pred_check
          %p267 = pneg %p73
        $region46: #{tpu_custom_call.1} parent=39 // pred_check_branch
          %269 = sbr.rel (%p267) target = $region48
        $region47: #{tpu_custom_call.1} parent=39 // pred_region
          %270 = dma.done %s263, 128
        $region48: #{tpu_custom_call.1} parent=39 // pred_fallthru
          _
        // Predicated region
        $region49: #{tpu_custom_call.1} parent=39 // pred_check
          %p271 = pneg %p94
        $region50: #{tpu_custom_call.1} parent=39 // pred_check_branch
          %273 = sbr.rel (%p271) target = $region52
        $region51: #{tpu_custom_call.1} parent=39 // pred_region
          %274 = dma.done [#allocation6], 1024
        $region52: #{tpu_custom_call.1} parent=39 // pred_fallthru
          _
        // Predicated region
        $region53: #{tpu_custom_call.1} parent=39 // pred_check
          %p275 = pneg %p115
        $region54: #{tpu_custom_call.1} parent=39 // pred_check_branch
          %277 = sbr.rel (%p275) target = $region56
        $region55: #{tpu_custom_call.1} parent=39 // pred_region
          %278 = dma.done [#allocation9], 1024
        $region56: #{tpu_custom_call.1} parent=39 // pred_fallthru
          _
        %s279 = sand.u32 %s34, 1
        %s280 = scalar_lea.sflag [#allocation3], %s279
        %s281 = sand.u32 %s34, 1
        %s282 = smul.addr %s281, 8
        %s283 = scalar_lea.vmem [#allocation2], %s282
        %p284 = pneg %p47
        %p285 = pneg %p44
        %s286 = sand.u32 %s26, 1
        %s287 = scalar_lea.sflag [#allocation6], %s286
        %s288 = sand.u32 %s60, 1
        %s289 = smul.addr %s288, 8
        %s290 = scalar_lea.vmem [#allocation5], %s289
        %p291 = pneg %p73
        %p292 = pneg %p70
        %p293 = pneg %p94
        %p294 = pneg %p91
        %p295 = pneg %p115
        %p296 = pneg %p112
        %p297 = pneg %p136
        %p298 = pneg %p133
        %p299 = pneg %p162
        %p300 = pneg %p159
        %s301 = sand.u32 %s149, 1
        %s302 = scalar_lea.sflag [#allocation4], %s301
        %s303 = sand.u32 %s149, 1
        %s304 = smul.addr %s303, 8
        %s305 = scalar_lea.vmem [#allocation10], %s304
        %v307 = vld [vmem:[%s257] sm:$0xff]
        %v308 = vpack.c.bf16 %v307, %v307
        %v309 = vld [vmem:[#allocation7] sm:$0xf]
        %v310 = vld [vmem:[#allocation7 + $0x4] sm:$0xf]
        %v311 = vld [vmem:[#allocation7 + $0x8] sm:$0xf]
        %v312 = vld [vmem:[#allocation7 + $0xc] sm:$0xf]
        %v313 = vld [vmem:[#allocation7 + $0x10] sm:$0xf]
        %v314 = vld [vmem:[#allocation7 + $0x14] sm:$0xf]
        %v315 = vld [vmem:[#allocation7 + $0x18] sm:$0xf]
        %v316 = vld [vmem:[#allocation7 + $0x1c] sm:$0xf]
        %v317 = vld [vmem:[#allocation7 + $0x20] sm:$0xf]
        %v318 = vld [vmem:[#allocation7 + $0x24] sm:$0xf]
        %v319 = vld [vmem:[#allocation7 + $0x28] sm:$0xf]
        %v320 = vld [vmem:[#allocation7 + $0x2c] sm:$0xf]
        %v321 = vld [vmem:[#allocation7 + $0x30] sm:$0xf]
        %v322 = vld [vmem:[#allocation7 + $0x34] sm:$0xf]
        %v323 = vld [vmem:[#allocation7 + $0x38] sm:$0xf]
        %v324 = vld [vmem:[#allocation7 + $0x3c] sm:$0xf]
        %v325 = vld [vmem:[%s266] sm:$0xff]
        %v326 = vpack.c.bf16 %v325, %v325
        %v327 = vld [vmem:[#allocation8] sm:$0xf]
        %v328 = vld [vmem:[#allocation8 + $0x4] sm:$0xf]
        %v329 = vld [vmem:[#allocation8 + $0x8] sm:$0xf]
        %v330 = vld [vmem:[#allocation8 + $0xc] sm:$0xf]
        %v331 = vld [vmem:[#allocation8 + $0x10] sm:$0xf]
        %v332 = vld [vmem:[#allocation8 + $0x14] sm:$0xf]
        %v333 = vld [vmem:[#allocation8 + $0x18] sm:$0xf]
        %v334 = vld [vmem:[#allocation8 + $0x1c] sm:$0xf]
        %v335 = vld [vmem:[#allocation8 + $0x20] sm:$0xf]
        %v336 = vld [vmem:[#allocation8 + $0x24] sm:$0xf]
        %v337 = vld [vmem:[#allocation8 + $0x28] sm:$0xf]
        %v338 = vld [vmem:[#allocation8 + $0x2c] sm:$0xf]
        %v339 = vld [vmem:[#allocation8 + $0x30] sm:$0xf]
        %v340 = vld [vmem:[#allocation8 + $0x34] sm:$0xf]
        %v341 = vld [vmem:[#allocation8 + $0x38] sm:$0xf]
        %v342 = vld [vmem:[#allocation8 + $0x3c] sm:$0xf]
        %v359 = vunpack.c.l.b16 %v327
        %v360 = vunpack.c.l.b16 %v328
        %v361 = vunpack.c.l.b16 %v329
        %v362 = vunpack.c.l.b16 %v330
        %v363 = vunpack.c.l.b16 %v331
        %v364 = vunpack.c.l.b16 %v332
        %v365 = vunpack.c.l.b16 %v333
        %v366 = vunpack.c.l.b16 %v334
        %v367 = vunpack.c.l.b16 %v335
        %v368 = vunpack.c.l.b16 %v336
        %v369 = vunpack.c.l.b16 %v337
        %v370 = vunpack.c.l.b16 %v338
        %v371 = vunpack.c.l.b16 %v339
        %v372 = vunpack.c.l.b16 %v340
        %v373 = vunpack.c.l.b16 %v341
        %v374 = vunpack.c.l.b16 %v342
        %v375 = vpack.c.b16 %v360, %v359
        %v376 = vpack.c.b16 %v362, %v361
        %v377 = vpack.c.b16 %v364, %v363
        %v378 = vpack.c.b16 %v366, %v365
        %v379 = vpack.c.b16 %v368, %v367
        %v380 = vpack.c.b16 %v370, %v369
        %v381 = vpack.c.b16 %v372, %v371
        %v382 = vpack.c.b16 %v374, %v373
        %391 = vmatprep.subr.bf16.mxu0 0
        %392 = vmatpush1.bf16.msra.mxu0 %v375
        %393 = vmatprep.subr.bf16.mxu0 0
        %394 = vmatpush1.bf16.msra.mxu0 %v376
        %395 = vmatprep.subr.bf16.mxu0 0
        %396 = vmatpush1.bf16.msra.mxu0 %v377
        %397 = vmatprep.subr.bf16.mxu0 0
        %398 = vmatpush1.bf16.msra.mxu0 %v378
        %399 = vmatprep.subr.bf16.mxu0 0
        %400 = vmatpush1.bf16.msra.mxu0 %v379
        %401 = vmatprep.subr.bf16.mxu0 0
        %402 = vmatpush1.bf16.msra.mxu0 %v380
        %403 = vmatprep.subr.bf16.mxu0 0
        %404 = vmatpush1.bf16.msra.mxu0 %v381
        %405 = vmatprep.subr.bf16.mxu0 0
        %406 = vmatpush1.bf16.msra.mxu0 %v382
        %407 = vmatprep.subr.bf16.mxu0 0
        %408 = vmatpush1.bf16.msra.mxu0 0
        %409 = vmatprep.subr.bf16.mxu0 0
        %410 = vmatpush1.bf16.msra.mxu0 0
        %411 = vmatprep.subr.bf16.mxu0 0
        %412 = vmatpush1.bf16.msra.mxu0 0
        %413 = vmatprep.subr.bf16.mxu0 0
        %414 = vmatpush1.bf16.msra.mxu0 0
        %415 = vmatprep.subr.bf16.mxu0 0
        %416 = vmatpush1.bf16.msra.mxu0 0
        %417 = vmatprep.subr.bf16.mxu0 0
        %418 = vmatpush1.bf16.msra.mxu0 0
        %419 = vmatprep.subr.bf16.mxu0 0
        %420 = vmatpush1.bf16.msra.mxu0 0
        %421 = vmatprep.subr.bf16.mxu0 0
        %422 = vmatpush1.bf16.msra.mxu0 0
        %423 = vmatprep.mubr.bf16.mxu0 0
        %424 = vmatmul.mubr.bf16.gmra.mrb[0].mxu0 %v326
        %v425 = vpop.f32.mrb[0].mxu0
        %v426 = vadd.f32 0.0, %v425
        %v427 = vpop.f32.mrb[0].mxu0
        %v428 = vpop.f32.mrb[0].mxu0
        %v429 = vpop.f32.mrb[0].mxu0
        %430 = vdwg.mxu0
        %v447 = vunpack.c.l.b16 %v309
        %v448 = vunpack.c.l.b16 %v310
        %v449 = vunpack.c.l.b16 %v311
        %v450 = vunpack.c.l.b16 %v312
        %v451 = vunpack.c.l.b16 %v313
        %v452 = vunpack.c.l.b16 %v314
        %v453 = vunpack.c.l.b16 %v315
        %v454 = vunpack.c.l.b16 %v316
        %v455 = vunpack.c.l.b16 %v317
        %v456 = vunpack.c.l.b16 %v318
        %v457 = vunpack.c.l.b16 %v319
        %v458 = vunpack.c.l.b16 %v320
        %v459 = vunpack.c.l.b16 %v321
        %v460 = vunpack.c.l.b16 %v322
        %v461 = vunpack.c.l.b16 %v323
        %v462 = vunpack.c.l.b16 %v324
        %v463 = vpack.c.b16 %v448, %v447
        %v464 = vpack.c.b16 %v450, %v449
        %v465 = vpack.c.b16 %v452, %v451
        %v466 = vpack.c.b16 %v454, %v453
        %v467 = vpack.c.b16 %v456, %v455
        %v468 = vpack.c.b16 %v458, %v457
        %v469 = vpack.c.b16 %v460, %v459
        %v470 = vpack.c.b16 %v462, %v461
        %479 = vmatprep.subr.bf16.mxu0 0
        %480 = vmatpush1.bf16.msra.mxu0 %v463
        %481 = vmatprep.subr.bf16.mxu0 0
        %482 = vmatpush1.bf16.msra.mxu0 %v464
        %483 = vmatprep.subr.bf16.mxu0 0
        %484 = vmatpush1.bf16.msra.mxu0 %v465
        %485 = vmatprep.subr.bf16.mxu0 0
        %486 = vmatpush1.bf16.msra.mxu0 %v466
        %487 = vmatprep.subr.bf16.mxu0 0
        %488 = vmatpush1.bf16.msra.mxu0 %v467
        %489 = vmatprep.subr.bf16.mxu0 0
        %490 = vmatpush1.bf16.msra.mxu0 %v468
        %491 = vmatprep.subr.bf16.mxu0 0
        %492 = vmatpush1.bf16.msra.mxu0 %v469
        %493 = vmatprep.subr.bf16.mxu0 0
        %494 = vmatpush1.bf16.msra.mxu0 %v470
        %495 = vmatprep.subr.bf16.mxu0 0
        %496 = vmatpush1.bf16.msra.mxu0 0
        %497 = vmatprep.subr.bf16.mxu0 0
        %498 = vmatpush1.bf16.msra.mxu0 0
        %499 = vmatprep.subr.bf16.mxu0 0
        %500 = vmatpush1.bf16.msra.mxu0 0
        %501 = vmatprep.subr.bf16.mxu0 0
        %502 = vmatpush1.bf16.msra.mxu0 0
        %503 = vmatprep.subr.bf16.mxu0 0
        %504 = vmatpush1.bf16.msra.mxu0 0
        %505 = vmatprep.subr.bf16.mxu0 0
        %506 = vmatpush1.bf16.msra.mxu0 0
        %507 = vmatprep.subr.bf16.mxu0 0
        %508 = vmatpush1.bf16.msra.mxu0 0
        %509 = vmatprep.subr.bf16.mxu0 0
        %510 = vmatpush1.bf16.msra.mxu0 0
        %511 = vmatprep.mubr.bf16.mxu0 0
        %512 = vmatmul.mubr.bf16.gmra.mrb[0].mxu0 %v308
        %v513 = vpop.f32.mrb[0].mxu0
        %v514 = vadd.f32 %v426, %v513
        %v515 = vpop.f32.mrb[0].mxu0
        %v516 = vpop.f32.mrb[0].mxu0
        %v517 = vpop.f32.mrb[0].mxu0
        %518 = vdwg.mxu0
        %v519 = vld [vmem:[%s4] sm:$0x1]
        %v520 = vlaneseq
        %v521 = vshrl.u32 %v520, 7
        %v522 = vsub.s32 0, %v521
        %v523 = vrot.slane %v519, %v522
        %v524 = vadd.f32 %v514, %v523
        %525 = vadd.xlane.f32.xlu0 %v524
        %v526 = vpop.xlane.xlu0 %525
        %v527 = vrcp.pop 128.0
        %v528 = vmul.f32 %v526, %v527
        %v529 = vsub.f32 %v524, %v528
        %v530 = vmul.f32 %v529, %v529
        %531 = vadd.xlane.f32.xlu0 %v530
        %v532 = vpop.xlane.xlu0 %531
        %v533 = vmul.f32 %v532, %v527
        %v534 = vadd.f32 %v533, 1e-06
        %v535 = vrsqrt.pop %v534
        %v536 = vmul.f32 %v529, %v535
        %v537 = vld [vmem:[%s4 + $0x1] sm:$0x1]
        %v538 = vlaneseq
        %v539 = vshrl.u32 %v538, 7
        %v540 = vsub.s32 0, %v539
        %v541 = vrot.slane %v537, %v540
        %v542 = vmul.f32 %v536, %v541
        %v543 = vld [vmem:[%s4 + $0x2] sm:$0x1]
        %v544 = vlaneseq
        %v545 = vshrl.u32 %v544, 7
        %v546 = vsub.s32 0, %v545
        %v547 = vrot.slane %v543, %v546
        %v548 = vadd.f32 %v542, %v547
        %549 = vst [vmem:[%s305] sm:$0xff] %v548
        %s550 = sand.u32 %s149, 1
        %s551 = scalar_lea.sflag [#allocation4], %s550
        %s552 = sand.u32 %s149, 1
        %s553 = smul.addr %s552, 8
        %s554 = scalar_lea.vmem [#allocation10], %s553
        // Predicated region
        $region57: #{tpu_custom_call.1} parent=39 // pred_check
          %p555 = pneg %p159
        $region58: #{tpu_custom_call.1} parent=39 // pred_check_branch
          %557 = sbr.rel (%p555) target = $region60
        $region59: #{tpu_custom_call.1} parent=39 // pred_region
          %s559 = ssub.s32 128, 128
          %560 = vsyncadd %s551, %s559
          %s561 = smul.addr %s26, 128
          %s562 = scalar_lea.hbm %s5, %s561
          %s564 = sshll.u32 %s554, 4
          %s565 = int_to_ptr.vmem [resolvable:$true] %s564
          %567 = dma.vmem_to_hbm [thread:$0]  %s565, 128, %s562, %s551
        $region60: #{tpu_custom_call.1} parent=39 // pred_fallthru
          _
      $region40: #{tpu_custom_call.1} parent=5 // pred_fallthru
        _
      %p568 = scmp.le.s32.totalorder 2, %s21
      // Predicated region
      $region61: #{tpu_custom_call.1} parent=5 // pred_check
        %p569 = pneg %p568
      $region62: #{tpu_custom_call.1} parent=5 // pred_check_branch
        %571 = sbr.rel (%p569) target = $region64
      $region63: #{tpu_custom_call.1} parent=5 // pred_region
        %s572 = ssub.s32 %s21, 2
        // Predicated region
        $region65: #{tpu_custom_call.1} parent=63 // pred_check
          %p573 = pneg %p165
        $region66: #{tpu_custom_call.1} parent=63 // pred_check_branch
          %575 = sbr.rel (%p573) target = $region68
        $region67: #{tpu_custom_call.1} parent=63 // pred_region
          %s576 = sand.u32 %s150, 1
          %s577 = scalar_lea.sflag [#allocation4], %s576
          %s578 = sand.u32 %s150, 1
          %s579 = smul.addr %s578, 8
          %s580 = scalar_lea.vmem [#allocation10], %s579
          %581 = dma.done %s577, 128
        $region68: #{tpu_custom_call.1} parent=63 // pred_fallthru
          _
      $region64: #{tpu_custom_call.1} parent=5 // pred_fallthru
        _
    $region6: #{tpu_custom_call.1} parent=1 // loop_footer
      %s25 = sadd.s32 1, %s21
    $region7: #{tpu_custom_call.1} parent=1 // loop_footer_branch
      %20 = sbr.rel target = $region3
    $region8: #{tpu_custom_call.1} parent=1 // loop_exit
      _
    %582 = vsyncpa [#allocation3], 1
    %s583 = scalar_lea.sflag [#allocation3], 1
    %584 = vsyncpa %s583, 1
    %585 = vsyncpa [#allocation6], 1
    %s586 = scalar_lea.sflag [#allocation6], 1
    %587 = vsyncpa %s586, 1
    %588 = vsyncpa [#allocation9], 1
    %589 = vsyncpa [#allocation4], 1
    %s590 = scalar_lea.sflag [#allocation4], 1
    %591 = vsyncpa %s590, 1

</llo_original>
